<compile_context>
chip_gen: v5e
topology: v5e:2x2
jax: 0.10.0
libtpu: 0.0.40
codegen_flags: <defaults>
</compile_context>

<pallas_src>
import jax
import jax.numpy as jnp
from jax.experimental import pallas as pl
from jax.experimental.pallas import tpu as pltpu


def _round_up(x, m):
    return ((x + m - 1) // m) * m


def _noisy_ce_kernel(p_ref, n_ref, logits_ref, targets_ref, partial_ref):
    """One row tile: writes sum over valid rows of (loss * weight) for this tile."""
    i = pl.program_id(0)
    tm = logits_ref.shape[0]
    c = logits_ref.shape[1]

    p = p_ref[0]          # f32 scalar (SMEM)
    n_rows = n_ref[0]     # i32 scalar (SMEM)

    logits = logits_ref[...].astype(jnp.float32)    # (TM, C) f32
    tgt = targets_ref[...]                          # (TM, 1) int32

    # Tail-tile guard: rows past the true batch size contribute zero.
    row = jax.lax.broadcasted_iota(jnp.int32, (tm, 1), 0) + i * tm
    valid = row < n_rows                            # (TM, 1) bool

    # One-hot as a boolean lane mask (used only to gather the target logit).
    col = jax.lax.broadcasted_iota(jnp.int32, logits.shape, 1)
    mask = col == tgt                               # (TM, C) bool

    # Stable log-softmax pieces; the +row_max / -row_max terms cancel in the loss.
    row_max = jnp.max(logits, axis=1, keepdims=True)                    # (TM, 1)
    shifted = logits - row_max                                          # (TM, C)
    sumexp = jnp.sum(jnp.exp(shifted), axis=1, keepdims=True)           # (TM, 1)
    tgt_shifted = jnp.sum(jnp.where(mask, shifted, 0.0), axis=1, keepdims=True)
    losses = jnp.log(sumexp) - tgt_shifted                              # (TM, 1)

    # weights = 1 - p + p * (1 - sum_c one_hot).  For integer targets the one-hot
    # row-sum is exactly the in-range indicator, so compute it as a cheap (TM,1)
    # range check instead of a full-width (TM,C) select + XLU reduction.
    in_range = ((tgt >= 0) & (tgt < c)).astype(jnp.float32)             # (TM, 1)
    weights = (1.0 - p) + p * (1.0 - in_range)                          # (TM, 1)

    contrib = jnp.where(valid, losses * weights, 0.0)
    partial_ref[...] = jnp.sum(contrib).reshape(1, 1)


def _choose_block_rows(n, c, itemsize, block_rows):
    """Row-tile size: ~4 MiB of logits (input dtype), multiple of 8, >=2 tiles."""
    if block_rows is not None:
        tm = max(8, _round_up(block_rows, 8))
    else:
        # ~4 MiB logits tile.  Mosaic double-buffers it and the in-kernel f32
        # temporaries (f32 cast, col iota, mask, exp) add ~4x an f32 tile, so
        # ~5-6x the tile stays comfortably under the 48 MiB scoped VMEM limit
        # (v7x physical VMEM = 64 MiB; v5e/v6e = 128 MiB).
        tile_bytes = 4 * 1024 * 1024
        tm = tile_bytes // max(c * itemsize, 1)
        tm = max(8, (tm // 8) * 8)
    tm = min(tm, _round_up(n, 8))          # never wider than the (padded) batch
    if n > 8:
        # Guarantee >= 2 grid steps so dimension_semantics=("parallel",) can
        # actually split work across the 2 v7x TensorCores.
        tm = min(tm, max(8, _round_up(pl.cdiv(n, 2), 8)))
    return tm


def noisy_cross_entropy_loss(logits, targets, p_noisy, *, block_rows=None):
    """logits: (N, C) float (f32 or bf16), targets: (N,) int -> scalar float32."""
    n, c = logits.shape
    itemsize = jnp.dtype(logits.dtype).itemsize

    tm = _choose_block_rows(n, c, itemsize, block_rows)
    n_tiles = pl.cdiv(n, tm)

    p_arr = jnp.asarray([p_noisy], dtype=jnp.float32)
    n_arr = jnp.asarray([n], dtype=jnp.int32)
    targets_2d = targets.astype(jnp.int32).reshape(n, 1)

    partials = pl.pallas_call(
        _noisy_ce_kernel,
        grid=(n_tiles,),
        out_shape=jax.ShapeDtypeStruct((n_tiles, 1), jnp.float32),
        in_specs=[
            pl.BlockSpec(memory_space=pltpu.MemorySpace.SMEM),   # p_noisy scalar
            pl.BlockSpec(memory_space=pltpu.MemorySpace.SMEM),   # n_rows scalar
            pl.BlockSpec((tm, c), lambda i: (i, 0)),             # logits row tile
            pl.BlockSpec((tm, 1), lambda i: (i, 0)),             # targets row tile
        ],
        out_specs=pl.BlockSpec((1, 1), lambda i: (i, 0)),        # per-tile partial sum
        compiler_params=pltpu.CompilerParams(
            dimension_semantics=("parallel",),
            vmem_limit_bytes=48 * 1024 * 1024,
        ),
    )(p_arr, n_arr, logits, targets_2d)

    # Tiny final reduction over per-tile partials (cheap XLA op).
    return jnp.sum(partials) / jnp.float32(n)


def _reference(logits, targets, p_noisy):
    logits = logits.astype(jnp.float32)
    n, c = logits.shape
    log_probs = jax.nn.log_softmax(logits, axis=-1)
    tgt = targets.reshape(n, 1).astype(jnp.int32)
    losses = -jnp.take_along_axis(log_probs, tgt, axis=1)[:, 0]
    onehot_sum = jax.nn.one_hot(targets, c, dtype=jnp.float32).sum(axis=1)
    weights = 1.0 - p_noisy + p_noisy * (1.0 - onehot_sum)
    return jnp.mean(losses * weights)


if __name__ == "__main__":
    key = jax.random.PRNGKey(0)
    p_noisy = 0.2
    k1, k2, k3, k4, k5, k6 = jax.random.split(key, 6)

    # Case 1: small tile-aligned batch (module's expected usage shape), single tile.
    N, C = 8, 16
    logits = jax.random.normal(k1, (N, C), dtype=jnp.float32)
    targets = jax.random.randint(k2, (N,), 0, C, dtype=jnp.int32)
    out = jax.block_until_ready(noisy_cross_entropy_loss(logits, targets, p_noisy))
    ref = _reference(logits, targets, p_noisy)
    assert jnp.allclose(out, ref, rtol=1e-5, atol=1e-5), (out, ref)

    # Case 2: ragged batch -> multi-tile grid (exercises the tail-row mask and the
    # ">=2 tiles for megacore" path).
    N2, C2 = 13, 16
    logits2 = jax.random.normal(k3, (N2, C2), dtype=jnp.float32)
    targets2 = jax.random.randint(k4, (N2,), 0, C2, dtype=jnp.int32)
    out2 = jax.block_until_ready(noisy_cross_entropy_loss(logits2, targets2, p_noisy))
    ref2 = _reference(logits2, targets2, p_noisy)
    assert jnp.allclose(out2, ref2, rtol=1e-5, atol=1e-5), (out2, ref2)

    # Case 3: bf16 logits travel through the DMA as bf16, cast to f32 per tile.
    N3, C3 = 16, 32
    logits3 = jax.random.normal(k5, (N3, C3), dtype=jnp.float32).astype(jnp.bfloat16)
    targets3 = jax.random.randint(k6, (N3,), 0, C3, dtype=jnp.int32)
    out3 = jax.block_until_ready(noisy_cross_entropy_loss(logits3, targets3, p_noisy))
    ref3 = _reference(logits3, targets3, p_noisy)
    assert jnp.allclose(out3, ref3, rtol=1e-4, atol=1e-4), (out3, ref3)

    print("KERNEL_OK")
</pallas_src>

<mosaic_0001>
module attributes {stable_mosaic.version = 11 : i64} {
  func.func @_noisy_ce_kernel(%arg0: i32, %arg1: memref<1xf32, #tpu.memory_space<smem>>, %arg2: memref<1xi32, #tpu.memory_space<smem>>, %arg3: memref<8x16xf32, #tpu.memory_space<vmem>>, %arg4: memref<8x1xi32, #tpu.memory_space<vmem>>, %arg5: memref<1x1xf32, #tpu.memory_space<vmem>>) attributes {dimension_semantics = [#tpu.dimension_semantics<parallel>], iteration_bounds = array<i64: 1>, scalar_prefetch = 0 : i64, scratch_operands = 0 : i64, tpu.core_type = #tpu.core_type<tc>, window_params = [{transform_indices = @transform_0, window_bounds = array<i64: 1>}, {transform_indices = @transform_1, window_bounds = array<i64: 1>}, {transform_indices = @transform_2, window_bounds = array<i64: 8, 16>}, {transform_indices = @transform_3, window_bounds = array<i64: 8, 1>}, {transform_indices = @transform_4, window_bounds = array<i64: 1, 1>}]} {
    %c0 = arith.constant 0 : index
    %0 = memref.load %arg1[%c0] : memref<1xf32, #tpu.memory_space<smem>>
    %c0_0 = arith.constant 0 : index
    %1 = memref.load %arg2[%c0_0] : memref<1xi32, #tpu.memory_space<smem>>
    %c0_1 = arith.constant 0 : index
    %c0_2 = arith.constant 0 : index
    %2 = vector.load %arg3[%c0_1, %c0_2] : memref<8x16xf32, #tpu.memory_space<vmem>>, vector<8x16xf32>
    %c0_3 = arith.constant 0 : index
    %c0_4 = arith.constant 0 : index
    %3 = vector.load %arg4[%c0_3, %c0_4] : memref<8x1xi32, #tpu.memory_space<vmem>>, vector<8x1xi32>
    %4 = tpu.iota {dimensions = array<i32: 0>} : vector<8x1xi32>
    %c8_i32 = arith.constant 8 : i32
    %5 = arith.muli %arg0, %c8_i32 : i32
    %6 = vector.broadcast %5 : i32 to vector<8x1xi32>
    %7 = arith.addi %4, %6 : vector<8x1xi32>
    %8 = vector.broadcast %1 : i32 to vector<8x1xi32>
    %9 = arith.cmpi slt, %7, %8 : vector<8x1xi32>
    %10 = tpu.iota {dimensions = array<i32: 1>} : vector<8x16xi32>
    %11 = vector.broadcast %3 : vector<8x1xi32> to vector<8x16xi32>
    %12 = arith.cmpi eq, %10, %11 : vector<8x16xi32>
    %cst = arith.constant dense<0xFF800000> : vector<8xf32>
    %13 = vector.multi_reduction <maximumf>, %2, %cst [1] : vector<8x16xf32> to vector<8xf32>
    %14 = vector.shape_cast %13 : vector<8xf32> to vector<8x1xf32>
    %15 = vector.broadcast %14 : vector<8x1xf32> to vector<8x16xf32>
    %16 = arith.subf %2, %15 : vector<8x16xf32>
    %17 = math.exp %16 : vector<8x16xf32>
    %cst_5 = arith.constant dense<0.000000e+00> : vector<8xf32>
    %18 = vector.multi_reduction <add>, %17, %cst_5 [1] : vector<8x16xf32> to vector<8xf32>
    %19 = vector.shape_cast %18 : vector<8xf32> to vector<8x1xf32>
    %cst_6 = arith.constant 0.000000e+00 : f32
    %20 = vector.broadcast %cst_6 : f32 to vector<8x16xf32>
    %21 = arith.select %12, %16, %20 : vector<8x16xi1>, vector<8x16xf32>
    %cst_7 = arith.constant dense<0.000000e+00> : vector<8xf32>
    %22 = vector.multi_reduction <add>, %21, %cst_7 [1] : vector<8x16xf32> to vector<8xf32>
    %23 = vector.shape_cast %22 : vector<8xf32> to vector<8x1xf32>
    %24 = math.log %19 : vector<8x1xf32>
    %25 = arith.subf %24, %23 : vector<8x1xf32>
    %c0_i32 = arith.constant 0 : i32
    %26 = vector.broadcast %c0_i32 : i32 to vector<8x1xi32>
    %27 = arith.cmpi sge, %3, %26 : vector<8x1xi32>
    %c16_i32 = arith.constant 16 : i32
    %28 = vector.broadcast %c16_i32 : i32 to vector<8x1xi32>
    %29 = arith.cmpi slt, %3, %28 : vector<8x1xi32>
    %30 = arith.andi %27, %29 : vector<8x1xi1>
    %31 = arith.extui %30 : vector<8x1xi1> to vector<8x1xi32>
    %32 = arith.sitofp %31 : vector<8x1xi32> to vector<8x1xf32>
    %cst_8 = arith.constant 1.000000e+00 : f32
    %33 = arith.subf %cst_8, %0 : f32
    %cst_9 = arith.constant 1.000000e+00 : f32
    %34 = vector.broadcast %cst_9 : f32 to vector<8x1xf32>
    %35 = arith.subf %34, %32 : vector<8x1xf32>
    %36 = vector.broadcast %0 : f32 to vector<8x1xf32>
    %37 = arith.mulf %36, %35 : vector<8x1xf32>
    %38 = vector.broadcast %33 : f32 to vector<8x1xf32>
    %39 = arith.addf %38, %37 : vector<8x1xf32>
    %40 = arith.mulf %25, %39 : vector<8x1xf32>
    %cst_10 = arith.constant 0.000000e+00 : f32
    %41 = vector.broadcast %cst_10 : f32 to vector<8x1xf32>
    %42 = arith.select %9, %40, %41 : vector<8x1xi1>, vector<8x1xf32>
    %43 = vector.shape_cast %42 : vector<8x1xf32> to vector<1x8x1xf32>
    %cst_11 = arith.constant dense<0.000000e+00> : vector<1xf32>
    %44 = vector.multi_reduction <add>, %43, %cst_11 [1, 2] : vector<1x8x1xf32> to vector<1xf32>
    %45 = vector.shape_cast %44 : vector<1xf32> to vector<1x1x1xf32>
    %46 = vector.extract %45[0, 0, 0] : f32 from vector<1x1x1xf32>
    %47 = vector.broadcast %46 : f32 to vector<1x1xf32>
    %c0_12 = arith.constant 0 : index
    %c0_13 = arith.constant 0 : index
    %48 = vector.load %arg5[%c0_12, %c0_13] : memref<1x1xf32, #tpu.memory_space<vmem>>, vector<1x1xf32>
    tpu.vector_store %arg5[%c0_12, %c0_13], %47 {strides = array<i32>} : memref<1x1xf32, #tpu.memory_space<vmem>>, vector<1x1xf32>,
    return
  }
  func.func @transform_0(%arg0: i32) -> i32 {
    %c0_i32 = arith.constant 0 : i32
    %c0_i32_0 = arith.constant 0 : i32
    return %c0_i32 : i32
  }
  func.func @transform_1(%arg0: i32) -> i32 {
    %c0_i32 = arith.constant 0 : i32
    %c0_i32_0 = arith.constant 0 : i32
    return %c0_i32 : i32
  }
  func.func @transform_2(%arg0: i32) -> (i32, i32) {
    %c0_i32 = arith.constant 0 : i32
    %c0_i32_0 = arith.constant 0 : i32
    return %arg0, %c0_i32 : i32, i32
  }
  func.func @transform_3(%arg0: i32) -> (i32, i32) {
    %c0_i32 = arith.constant 0 : i32
    %c0_i32_0 = arith.constant 0 : i32
    return %arg0, %c0_i32 : i32, i32
  }
  func.func @transform_4(%arg0: i32) -> (i32, i32) {
    %c0_i32 = arith.constant 0 : i32
    %c0_i32_0 = arith.constant 0 : i32
    return %arg0, %c0_i32 : i32, i32
  }
}

</mosaic_0001>

<llo_original>
// kernel: tpu_custom_call.1
$region0: #{tpu_custom_call.1}
  #allocation0 [shape = 'u32[]', space=smem, size = 0x4, offset = 0x4, fixed_abs, tag = 'smem constant byte address 0x4 - core index']
  #allocation1 [shape = 'u32[72,128]{1,0:T(1,128)}', space=vmem, size = 0x9000, scoped, tag = 'internal scratch']
  #allocation2 [shape = 'f32[1]{0:T(128)S(6)}', space=smem, size = 0x200, scoped, tag = 'scoped memory for tpu_custom_call.1']
  #allocation3 [shape = 's32[1]{0:T(128)S(6)}', space=smem, size = 0x200, scoped, tag = 'scoped memory for tpu_custom_call.1']
  %s0 = inlined_call_operand.<no memory space> [shape: f32[1], index: 0, kind: input, shape index: {}]
  %s1 = inlined_call_operand.<no memory space> [shape: s32[1], index: 1, kind: input, shape index: {}]
  %s2 = inlined_call_operand.vmem [shape: f32[8,16], index: 2, kind: input, shape index: {}]
  %s3 = inlined_call_operand.vmem [shape: s32[8,1], index: 3, kind: input, shape index: {}]
  %s4 = inlined_call_operand.hbm [shape: f32[1,1], index: 4, kind: output, shape index: {}]
  %s5 = sld [smem:[#allocation0]]
  $region26: #{tpu_custom_call.1} parent=0
    _
  %s7 = ssub.s32 1, %s5
  %s8 = scalar_select 0, %s7, %s5
  %9 = sst [smem:[#allocation2]] %s0
  %10 = sst [smem:[#allocation3]] %s1
  $region1: #{tpu_custom_call.1} parent=0
    #allocation4 [shape = 'u8[512]{0}', space=vmem, size = 0x400, scoped, tag = 'output window, operand 0, single buffered']
    #allocation5 [shape = 's32[1]{0}', space=sflag, size = 0x4, scoped, tag = 'scoped memory for tpu_custom_call.1']
    %11 = vsyncpa [#allocation5], 0
    // Predicated region
    $region2: #{tpu_custom_call.1} parent=1 // pred_check
      _
    $region3: #{tpu_custom_call.1} parent=1 // pred_check_branch
      %13 = sbr.rel (0) target = $region5
    $region4: #{tpu_custom_call.1} parent=1 // pred_region
      _
    $region5: #{tpu_custom_call.1} parent=1 // pred_fallthru
      _
    // Predicated region
    $region6: #{tpu_custom_call.1} parent=1 // pred_check
      _
    $region7: #{tpu_custom_call.1} parent=1 // pred_check_branch
      %15 = sbr.rel (0) target = $region9
    $region8: #{tpu_custom_call.1} parent=1 // pred_region
      _
    $region9: #{tpu_custom_call.1} parent=1 // pred_fallthru
      _
    // Predicated region
    $region10: #{tpu_custom_call.1} parent=1 // pred_check
      _
    $region11: #{tpu_custom_call.1} parent=1 // pred_check_branch
      %17 = sbr.rel (0) target = $region13
    $region12: #{tpu_custom_call.1} parent=1 // pred_region
      _
    $region13: #{tpu_custom_call.1} parent=1 // pred_fallthru
      _
    // Predicated region
    $region14: #{tpu_custom_call.1} parent=1 // pred_check
      _
    $region15: #{tpu_custom_call.1} parent=1 // pred_check_branch
      %19 = sbr.rel (0) target = $region17
    $region16: #{tpu_custom_call.1} parent=1 // pred_region
      _
    $region17: #{tpu_custom_call.1} parent=1 // pred_fallthru
      _
    %s20 = sld [smem:[#allocation2]]
    %s21 = sld [smem:[#allocation3]]
    %v22 = vld [vmem:[%s2] sm:$0xff]
    %v23 = vld [vmem:[%s3] sm:$0xff]
    %v24 = vlaneseq
    %v25 = vshrl.u32 %v24, 7
    %s26 = smul.u32 0, 8
    %v27 = vstv %s26
    %v28 = vadd.s32 %v25, %v27
    %v29 = vstv %s21
    %vm30 = vcmp.lt.s32.totalorder %v28, %v29
    %v31 = vlaneseq
    %v32 = vand.u32 %v31, 127
    %33 = vset.pattern.permute.xlu0 0
    %34 = vperm.xlu0 %33, %v23
    %v35 = vpop.permute.xlu0 %34
    %vm36 = vcmp.eq.s32.totalorder %v32, %v35
    %vm37 = vcmask 130048
    %v38 = vsel %vm37, %v22, -inf
    %39 = vmax.xlane.f32.xlu0 %v38
    %v40 = vpop.xlane.xlu0 %39
    %v41 = vsub.f32 %v22, %v40
    %v42 = vmul.f32 %v41, 1.442695
    %v43 = vpow.pop %v42
    %v44 = vsel %vm37, %v43, 0.0
    %45 = vadd.xlane.f32.xlu0 %v44
    %v46 = vpop.xlane.xlu0 %45
    %v47 = vsel %vm36, %v41, 0.0
    %v48 = vsel %vm37, %v47, 0.0
    %49 = vadd.xlane.f32.xlu0 %v48
    %v50 = vpop.xlane.xlu0 %49
    %v51 = vlog2.pop %v46
    %v52 = vmul.f32 %v51, 0.6931472
    %v53 = vsub.f32 %v52, %v50
    %vm54 = vcmp.ge.s32.totalorder %v23, 0
    %vm55 = vcmp.lt.s32.totalorder %v23, 16
    %vm56 = vmand %vm54, %vm55
    %v57 = vsel %vm56, 1, 0
    %v58 = vcvt.s32.f32 %v57
    %s59 = ssub.f32 1.0, %s20
    %v60 = vsub.f32 1.0, %v58
    %v61 = vstv %s20
    %v62 = vmul.f32 %v61, %v60
    %v63 = vstv %s59
    %v64 = vadd.f32 %v63, %v62
    %v65 = vmul.f32 %v53, %v64
    %v66 = vsel %vm30, %v65, 0.0
    %vm67 = vcmask 7168
    %v68 = vsel %vm67, %v66, 0.0
    %69 = vadd.xlane.f32.xlu0 %v68
    %v70 = vpop.xlane.xlu0 %69
    %v71 = vrot.slane %v70, 4
    %v72 = vadd.f32 %v70, %v71
    %v73 = vrot.slane %v72, 2
    %v74 = vadd.f32 %v72, %v73
    %v75 = vrot.slane %v74, 1
    %v76 = vadd.f32 %v74, %v75
    %s77 = vtos %v76
    %v78 = vstv %s77
    %vm79 = vcmask 0
    %80 = vst.msk [vmem:[#allocation4] sm:$0x1] %vm79, %v78
    // Predicated region
    $region18: #{tpu_custom_call.1} parent=1 // pred_check
      _
    $region19: #{tpu_custom_call.1} parent=1 // pred_check_branch
      %82 = sbr.rel (0) target = $region21
    $region20: #{tpu_custom_call.1} parent=1 // pred_region
      %84 = vsyncadd [#allocation5], 0
      %s86 = sshll.u32 [#allocation4], 4
      %s87 = int_to_ptr.vmem [resolvable:$true] %s86
      %s88 = sshll.u32 %s4, 4
      %s89 = int_to_ptr.hbm [resolvable:$true] %s88
      %91 = dma.vmem_to_hbm [thread:$0]  %s87, 16, %s89, [#allocation5]
    $region21: #{tpu_custom_call.1} parent=1 // pred_fallthru
      _
    // Predicated region
    $region22: #{tpu_custom_call.1} parent=1 // pred_check
      _
    $region23: #{tpu_custom_call.1} parent=1 // pred_check_branch
      %93 = sbr.rel (0) target = $region25
    $region24: #{tpu_custom_call.1} parent=1 // pred_region
      %95 = dma.done [#allocation5], 16
    $region25: #{tpu_custom_call.1} parent=1 // pred_fallthru
      _
    %96 = vsyncpa [#allocation5], 1

</llo_original>
